<compile_context>
chip_gen: v6e
topology: v6e:2x2x1
jax: 0.10.0
libtpu: 0.0.40
codegen_flags: <defaults>
</compile_context>

<pallas_src>
import jax
import jax.numpy as jnp
from jax.experimental import pallas as pl
from jax.experimental.pallas import tpu as pltpu


def attention_pooling_kernel(x_ref, w1_ref, b1_ref, w2_ref, out_ref):
    # x_ref : [TB, S, D]   (TB batch rows per grid step)
    # w1_ref: [D, H], b1_ref: [1, H]
    # w2_ref: [1, H]       (second Linear's weight as a row; its bias is
    #                       dropped — softmax over seq is shift-invariant)
    # out_ref: [TB, D]
    TB, S, D = x_ref.shape
    H = w1_ref.shape[1]

    x = x_ref[...]                                   # keep input dtype (bf16 feeds MXU natively)
    x2d = x.reshape(TB * S, D)                       # leading-dim collapse -> one big matmul

    # attention MLP: Linear -> tanh   (f32 accumulation on the MXU, tanh on EUP)
    h = jnp.tanh(
        jnp.dot(x2d, w1_ref[...], preferred_element_type=jnp.float32)
        + b1_ref[...]
    )                                                # [TB*S, H] f32
    # TODO(synk): if a v7x bundle dump ever shows the EUP slot binding, do the
    # tanh in bf16 there (not on v5e — no bf16 EUP/VPU).

    # Second Linear (H -> 1): VPU multiply + lane reduction, 2-D result
    # (no [TB, S, 1] singleton-lane vregs on the softmax path).
    h3 = h.reshape(TB, S, H)                         # leading-dim expand (layout-preserving)
    scores = jnp.sum(h3 * w2_ref[...], axis=-1)      # [TB, S] f32

    # softmax over the sequence axis, per batch row
    m = jnp.max(scores, axis=-1, keepdims=True)      # [TB, 1]
    e = jnp.exp(scores - m)                          # [TB, S]
    denom = jnp.sum(e, axis=-1, keepdims=True)       # [TB, 1]
    # approx reciprocal -> EUP; softmax weights sum to 1 only to ~1e-3 rel. error.
    attn_w = e * pl.reciprocal(denom, approx=True)   # [TB, S] f32

    # Dropout is identity in eval mode (inference kernel).
    # TODO(synk): add pltpu.prng_* Bernoulli masking on attn_w for a training-mode kernel.

    # Weighted pooling over seq, in f32 (v5e VPU has no bf16 ALU; kernel is
    # mem-bound, so f32 costs nothing on v6e/v7x).  One lane-broadcast of
    # attn_w into the D axis.
    pooled = jnp.sum(x.astype(jnp.float32) * attn_w[:, :, None], axis=1)   # [TB, D]
    out_ref[...] = pooled.astype(out_ref.dtype)
    # NOTE: D=32 makes this a 32-of-128-lane store; if xprof ever shows the
    # store phase binding at production B, pack a lane-dense output slab
    # wrapper-side rather than in-kernel.


def _pad_to(v, m):
    return -(-v // m) * m


def _per_row_vmem_bytes(S, D, H, x_itemsize):
    """Approximate live VMEM bytes per batch row inside the kernel."""
    s_pad = _pad_to(max(S, 1), 8)
    d_pad = _pad_to(D, 128)       # lane padding: D=32 tiles occupy full 128-lane vregs
    h_pad = _pad_to(H, 128)
    x_tile = 2 * s_pad * d_pad * x_itemsize      # double-buffered x tile
    h_tile = s_pad * h_pad * 4                   # tanh activations (f32)
    p_tile = s_pad * d_pad * 4                   # f32 pooling product
    o_tile = 2 * d_pad * 4                       # double-buffered output row
    return x_tile + h_tile + p_tile + o_tile


# Keep well under v7x's 32 MiB default scoped VMEM limit (64 MiB physical);
# on v5e/v6e (128 MiB VMEM) this is simply conservative.
_VMEM_TILE_BUDGET = 20 * (1 << 20)


def _pick_batch_tile(B, S, D, H, x_itemsize):
    """Largest TB (divisor of B, sublane-aligned) whose footprint fits the budget.

    Among the fitting tiles, prefer one that leaves an even grid of >= 2 steps
    (so v7x's 2 TensorCores can shard the 'parallel' batch axis) as long as
    that keeps the tile at least half of the largest fit; on 1-TC chips the
    extra grid step costs ~0.35 us, which is noise at these tile sizes.
    """
    row = _per_row_vmem_bytes(S, D, H, x_itemsize)
    divisors = [d for d in range(1, B + 1) if B % d == 0]
    legal = [d for d in divisors if d % 8 == 0 or d == B]      # (8, _) output block alignment
    fits = [d for d in legal if d * row <= _VMEM_TILE_BUDGET] or [min(legal)]
    best = max(fits)
    even_grid = [d for d in fits if (B // d) >= 2 and (B // d) % 2 == 0]
    if even_grid and 2 * max(even_grid) >= best:
        return max(even_grid)
    return best


def attention_pooling(x, w1, b1, w2, *, tb=None):
    """x: [B, S, D]; w1: [D, H]; b1: [H]; w2: [H, 1] or [H]. Returns [B, D].

    The second Linear's bias is intentionally omitted: softmax over the seq
    axis is shift-invariant, so adding it cannot change the result.
    """
    B, S, D = x.shape
    H = w1.shape[1]
    TB = _pick_batch_tile(B, S, D, H, x.dtype.itemsize) if tb is None else tb
    assert B % TB == 0, (B, TB)

    b1_row = b1.reshape(1, H).astype(jnp.float32)
    w2_row = w2.reshape(1, H).astype(jnp.float32)

    # Explicit VMEM cap derived from the real (lane-padded) footprint, clamped
    # so it is generation-safe: >= the 32 MiB v6e/v7x default, <= 56 MiB so it
    # never exceeds v7x's 64 MiB physical per-TC VMEM.
    row = _per_row_vmem_bytes(S, D, H, x.dtype.itemsize)
    weight_bytes = 2 * (_pad_to(D, 8) * _pad_to(H, 128) + 2 * _pad_to(H, 128)) * 4
    footprint = TB * row + weight_bytes
    vmem_limit = int(min(56 * (1 << 20), max(32 * (1 << 20), 2 * footprint)))

    cost = pl.CostEstimate(
        flops=2 * B * S * D * H + 3 * B * S * H + 4 * B * S * D,
        transcendentals=B * S * (H + 1),                 # tanh + exp
        bytes_accessed=(x.size + B * D) * x.dtype.itemsize + (w1.size + 2 * H) * 4,
    )

    return pl.pallas_call(
        attention_pooling_kernel,
        out_shape=jax.ShapeDtypeStruct((B, D), x.dtype),
        grid_spec=pl.GridSpec(
            grid=(B // TB,),
            in_specs=[
                pl.BlockSpec((TB, S, D), lambda b: (b, 0, 0)),   # x tile: TB batch rows
                pl.BlockSpec((D, H), lambda b: (0, 0)),          # W1 (resident across steps)
                pl.BlockSpec((1, H), lambda b: (0, 0)),          # b1
                pl.BlockSpec((1, H), lambda b: (0, 0)),          # W2 as a row
            ],
            out_specs=pl.BlockSpec((TB, D), lambda b: (b, 0)),
        ),
        compiler_params=pltpu.CompilerParams(
            dimension_semantics=("parallel",),
            vmem_limit_bytes=vmem_limit,
        ),
        cost_estimate=cost,
    )(x, w1, b1_row, w2_row)


def reference_attention_pooling(x, w1, b1, w2, b2):
    """Pure-JAX reference matching the PyTorch forward (dropout in eval mode)."""
    x = x.astype(jnp.float32)
    scores = jnp.tanh(x @ w1.astype(jnp.float32) + b1) @ w2.astype(jnp.float32) + b2
    attn_w = jax.nn.softmax(scores, axis=1)                  # softmax over seq
    return jnp.sum(x * attn_w, axis=1)                       # [B, D]


if __name__ == "__main__":
    # Small shapes consistent with the module: d_model=32, hidden_dim=128.
    # B=32 so the batch-tiling path (TB=16, grid=2, even for megacore) is exercised.
    B, S, D, H = 32, 8, 32, 128

    key = jax.random.PRNGKey(0)
    kx, k1, k2, k3, k4 = jax.random.split(key, 5)

    x = jax.random.normal(kx, (B, S, D), dtype=jnp.float32)
    # Deterministic synthetic parameters (not a checkpoint load).
    w1 = jax.random.normal(k1, (D, H), dtype=jnp.float32) * 0.1
    b1 = jax.random.normal(k2, (H,), dtype=jnp.float32) * 0.1
    w2 = jax.random.normal(k3, (H, 1), dtype=jnp.float32) * 0.1
    b2 = jax.random.normal(k4, (1,), dtype=jnp.float32) * 0.1

    out = attention_pooling(x, w1, b1, w2)
    out = jax.block_until_ready(out)

    # Reference keeps b2 — the match confirms dropping it in-kernel is exact
    # (softmax shift-invariance), modulo the approx reciprocal (~1e-3 rel).
    ref = reference_attention_pooling(x, w1, b1, w2, b2)
    assert out.shape == (B, D), out.shape
    assert jnp.allclose(out, ref, atol=5e-3, rtol=5e-3), (
        f"f32 max abs diff = {jnp.max(jnp.abs(out - ref))}"
    )

    # bf16 input path (exercises (8, 32) block legality and the f32-pool math).
    Bb = 16
    xb = jax.random.normal(kx, (Bb, S, D), dtype=jnp.bfloat16)
    w1b = w1.astype(jnp.bfloat16)
    out_b = attention_pooling(xb, w1b, b1, w2)
    out_b = jax.block_until_ready(out_b)
    ref_b = reference_attention_pooling(xb, w1b, b1, w2, b2)
    assert out_b.shape == (Bb, D), out_b.shape
    assert jnp.allclose(out_b.astype(jnp.float32), ref_b, atol=3e-2, rtol=3e-2), (
        f"bf16 max abs diff = {jnp.max(jnp.abs(out_b.astype(jnp.float32) - ref_b))}"
    )

    print("KERNEL_OK")
</pallas_src>

<mosaic_0001>
module attributes {stable_mosaic.version = 11 : i64} {
  func.func @attention_pooling_kernel(%arg0: i32, %arg1: memref<16x8x32xf32, #tpu.memory_space<vmem>>, %arg2: memref<32x128xf32, #tpu.memory_space<vmem>>, %arg3: memref<1x128xf32, #tpu.memory_space<vmem>>, %arg4: memref<1x128xf32, #tpu.memory_space<vmem>>, %arg5: memref<16x32xf32, #tpu.memory_space<vmem>>) attributes {dimension_semantics = [#tpu.dimension_semantics<parallel>], iteration_bounds = array<i64: 2>, scalar_prefetch = 0 : i64, scratch_operands = 0 : i64, tpu.core_type = #tpu.core_type<tc>, window_params = [{transform_indices = @transform_0, window_bounds = array<i64: 16, 8, 32>}, {pipeline_mode = #tpu.pipeline_mode<synchronous>, transform_indices = @transform_1, window_bounds = array<i64: 32, 128>}, {pipeline_mode = #tpu.pipeline_mode<synchronous>, transform_indices = @transform_2, window_bounds = array<i64: 1, 128>}, {pipeline_mode = #tpu.pipeline_mode<synchronous>, transform_indices = @transform_3, window_bounds = array<i64: 1, 128>}, {transform_indices = @transform_4, window_bounds = array<i64: 16, 32>}]} {
    %c0 = arith.constant 0 : index
    %c0_0 = arith.constant 0 : index
    %c0_1 = arith.constant 0 : index
    %0 = vector.load %arg1[%c0, %c0_0, %c0_1] : memref<16x8x32xf32, #tpu.memory_space<vmem>>, vector<16x8x32xf32>
    %1 = vector.shape_cast %0 : vector<16x8x32xf32> to vector<128x32xf32>
    %c0_2 = arith.constant 0 : index
    %c0_3 = arith.constant 0 : index
    %2 = vector.load %arg2[%c0_2, %c0_3] : memref<32x128xf32, #tpu.memory_space<vmem>>, vector<32x128xf32>
    %cst = arith.constant dense<0.000000e+00> : vector<128x128xf32>
    %3 = tpu.matmul %1, %2, %cst {dimension_numbers = #tpu.dot_dimension_numbers<[1], [0], [0], [1], [0, 0, 1, 1], [], []>} : vector<128x32xf32>, vector<32x128xf32>, vector<128x128xf32> -> vector<128x128xf32>
    %c0_4 = arith.constant 0 : index
    %c0_5 = arith.constant 0 : index
    %4 = vector.load %arg3[%c0_4, %c0_5] : memref<1x128xf32, #tpu.memory_space<vmem>>, vector<1x128xf32>
    %5 = vector.broadcast %4 : vector<1x128xf32> to vector<128x128xf32>
    %6 = arith.addf %3, %5 : vector<128x128xf32>
    %7 = math.tanh %6 : vector<128x128xf32>
    %8 = vector.shape_cast %7 : vector<128x128xf32> to vector<16x8x128xf32>
    %c0_6 = arith.constant 0 : index
    %c0_7 = arith.constant 0 : index
    %9 = vector.load %arg4[%c0_6, %c0_7] : memref<1x128xf32, #tpu.memory_space<vmem>>, vector<1x128xf32>
    %10 = vector.shape_cast %9 : vector<1x128xf32> to vector<1x1x128xf32>
    %11 = vector.broadcast %10 : vector<1x1x128xf32> to vector<16x8x128xf32>
    %12 = arith.mulf %8, %11 : vector<16x8x128xf32>
    %cst_8 = arith.constant dense<0.000000e+00> : vector<16x8xf32>
    %13 = vector.multi_reduction <add>, %12, %cst_8 [2] : vector<16x8x128xf32> to vector<16x8xf32>
    %cst_9 = arith.constant dense<0xFF800000> : vector<16xf32>
    %14 = vector.multi_reduction <maximumf>, %13, %cst_9 [1] : vector<16x8xf32> to vector<16xf32>
    %15 = vector.shape_cast %14 : vector<16xf32> to vector<16x1xf32>
    %16 = vector.broadcast %15 : vector<16x1xf32> to vector<16x8xf32>
    %17 = arith.subf %13, %16 : vector<16x8xf32>
    %18 = math.exp %17 : vector<16x8xf32>
    %cst_10 = arith.constant dense<0.000000e+00> : vector<16xf32>
    %19 = vector.multi_reduction <add>, %18, %cst_10 [1] : vector<16x8xf32> to vector<16xf32>
    %20 = vector.shape_cast %19 : vector<16xf32> to vector<16x1xf32>
    %21 = tpu.reciprocal %20 {approx = true} : vector<16x1xf32> -> vector<16x1xf32>
    %22 = vector.broadcast %21 : vector<16x1xf32> to vector<16x8xf32>
    %23 = arith.mulf %18, %22 : vector<16x8xf32>
    %24 = vector.shape_cast %23 : vector<16x8xf32> to vector<16x8x1xf32>
    %25 = vector.broadcast %24 : vector<16x8x1xf32> to vector<16x8x32xf32>
    %26 = arith.mulf %0, %25 : vector<16x8x32xf32>
    %cst_11 = arith.constant dense<0.000000e+00> : vector<16x32xf32>
    %27 = vector.multi_reduction <add>, %26, %cst_11 [1] : vector<16x8x32xf32> to vector<16x32xf32>
    %c0_12 = arith.constant 0 : index
    %c0_13 = arith.constant 0 : index
    %28 = vector.load %arg5[%c0_12, %c0_13] : memref<16x32xf32, #tpu.memory_space<vmem>>, vector<16x32xf32>
    tpu.vector_store %arg5[%c0_12, %c0_13], %27 {strides = array<i32>} : memref<16x32xf32, #tpu.memory_space<vmem>>, vector<16x32xf32>,
    return
  }
  func.func @transform_0(%arg0: i32) -> (i32, i32, i32) {
    %c0_i32 = arith.constant 0 : i32
    %c0_i32_0 = arith.constant 0 : i32
    %c0_i32_1 = arith.constant 0 : i32
    return %arg0, %c0_i32, %c0_i32_0 : i32, i32, i32
  }
  func.func @transform_1(%arg0: i32) -> (i32, i32) {
    %c0_i32 = arith.constant 0 : i32
    %c0_i32_0 = arith.constant 0 : i32
    %c0_i32_1 = arith.constant 0 : i32
    return %c0_i32, %c0_i32_0 : i32, i32
  }
  func.func @transform_2(%arg0: i32) -> (i32, i32) {
    %c0_i32 = arith.constant 0 : i32
    %c0_i32_0 = arith.constant 0 : i32
    %c0_i32_1 = arith.constant 0 : i32
    return %c0_i32, %c0_i32_0 : i32, i32
  }
  func.func @transform_3(%arg0: i32) -> (i32, i32) {
    %c0_i32 = arith.constant 0 : i32
    %c0_i32_0 = arith.constant 0 : i32
    %c0_i32_1 = arith.constant 0 : i32
    return %c0_i32, %c0_i32_0 : i32, i32
  }
  func.func @transform_4(%arg0: i32) -> (i32, i32) {
    %c0_i32 = arith.constant 0 : i32
    %c0_i32_0 = arith.constant 0 : i32
    return %arg0, %c0_i32 : i32, i32
  }
}

</mosaic_0001>

<llo_original>
// kernel: tpu_custom_call.1
$region0: #{tpu_custom_call.1}
  #allocation0 [shape = 'u32[]', space=smem, size = 0x4, offset = 0x4, fixed_abs, tag = 'smem constant byte address 0x4 - core index']
  #allocation1 [shape = 'u32[144,128]{1,0:T(1,128)}', space=vmem, size = 0x12000, scoped, tag = 'internal scratch']
  %s0 = inlined_call_operand.hbm [shape: f32[32,8,32], index: 0, kind: input, shape index: {}]
  %s1 = inlined_call_operand.hbm [shape: f32[32,128], index: 1, kind: input, shape index: {}]
  %s2 = inlined_call_operand.vmem [shape: f32[1,128], index: 2, kind: input, shape index: {}]
  %s3 = inlined_call_operand.vmem [shape: f32[1,128], index: 3, kind: input, shape index: {}]
  %s4 = inlined_call_operand.hbm [shape: f32[32,32], index: 4, kind: output, shape index: {}]
  %s5 = sld [smem:[#allocation0]]
  $region57: #{tpu_custom_call.1} parent=0
    _
  %s7 = ssub.s32 1, %s5
  %s8 = scalar_select 0, %s7, %s5
  $region1: #{tpu_custom_call.1} parent=0
    #allocation2 [shape = 'u8[131072]{0}', space=vmem, size = 0x20000, scoped, tag = 'input window, operand 0']
    #allocation3 [shape = 's32[2]{0}', space=sflag, size = 0x8, scoped, tag = 'scoped memory for tpu_custom_call.1']
    #allocation4 [shape = 's32[2]{0}', space=sflag, size = 0x8, scoped, tag = 'scoped memory for tpu_custom_call.1']
    #allocation5 [shape = 'u8[16384]{0}', space=vmem, size = 0x4000, scoped, tag = 'input window, operand 1, single buffered']
    #allocation6 [shape = 's32[1]{0}', space=sflag, size = 0x4, scoped, tag = 'scoped memory for tpu_custom_call.1']
    #allocation7 [shape = 'u8[16384]{0}', space=vmem, size = 0x4000, scoped, tag = 'output window, operand 0']
    %9 = vsyncpa [#allocation3], 0
    %s10 = scalar_lea.sflag [#allocation3], 1
    %11 = vsyncpa %s10, 0
    %12 = vsyncpa [#allocation6], 0
    %13 = vsyncpa [#allocation4], 0
    %s14 = scalar_lea.sflag [#allocation4], 1
    %15 = vsyncpa %s14, 0
    loop: start=0, step=1, limit=4
    $region2: #{tpu_custom_call.1} parent=1 // loop_pre_header
      _
    $region3: #{tpu_custom_call.1} parent=1 // loop_header
      %s17 = sphi 0, %s21
      %p18 = scmp.ge.s32.totalorder %s17, 4
      %s27 = sphi 0, %s29
      %s30 = sphi 0, %s27
      %s31 = sphi 0, %s30
      %s47 = sphi 0, %s31
      %s51 = sphi 0, %s51
      %s53 = sphi 0, %s51
      %s54 = sphi 0, %s53
      %s68 = sphi 0, %s54
      %s72 = sphi 0, %s72
      %s74 = sphi 0, %s72
      %s75 = sphi 0, %s74
      %s89 = sphi 0, %s75
      %s93 = sphi 0, %s93
      %s95 = sphi 0, %s93
      %s96 = sphi 0, %s95
      %s110 = sphi 0, %s96
      %s116 = sphi 0, %s118
      %s119 = sphi 0, %s116
      %s120 = sphi 0, %s119
      %s136 = sphi 0, %s120
    $region4: #{tpu_custom_call.1} parent=1 // loop_header_branch
      %20 = sbr.rel (%p18) target = $region8
    $region5: #{tpu_custom_call.1} parent=1 // loop_body
      %s22 = ssub.s32 %s17, 1
      %s23 = ssub.s32 %s17, 2
      %s24 = sadd.s32 %s17, 1
      %s25 = ssub.s32 %s17, %s24
      %p26 = scmp.eq.s32.totalorder %s25, 0
      %s28 = sadd.s32 %s27, 1
      %s29 = scalar_select %p26, %s27, %s28
      %p32 = pneg %p26
      %p33 = scmp.eq.s32.totalorder %s17, 1
      %p34 = por %p32, %p33
      %p35 = scmp.ne.s32.totalorder %s27, %s30
      %p36 = scmp.eq.s32.totalorder %s17, 0
      %p37 = por %p35, %p36
      %p38 = scmp.ne.s32.totalorder %s27, %s30
      %p39 = scmp.eq.s32.totalorder %s22, 1
      %p40 = por %p38, %p39
      %p41 = scmp.ne.s32.totalorder %s30, %s31
      %p42 = scmp.eq.s32.totalorder %s22, 0
      %p43 = por %p41, %p42
      %p44 = scmp.ne.s32.totalorder %s30, %s31
      %p45 = scmp.eq.s32.totalorder %s23, 1
      %p46 = por %p44, %p45
      %p48 = scmp.ne.s32.totalorder %s31, %s47
      %p49 = scmp.eq.s32.totalorder %s23, 0
      %p50 = por %p48, %p49
      %s52 = sadd.s32 %s51, 1
      %p55 = scmp.eq.s32.totalorder %s17, 1
      %p56 = scmp.ne.s32.totalorder %s51, %s53
      %p57 = scmp.eq.s32.totalorder %s17, 0
      %p58 = por %p56, %p57
      %p59 = scmp.ne.s32.totalorder %s51, %s53
      %p60 = scmp.eq.s32.totalorder %s22, 1
      %p61 = por %p59, %p60
      %p62 = scmp.ne.s32.totalorder %s53, %s54
      %p63 = scmp.eq.s32.totalorder %s22, 0
      %p64 = por %p62, %p63
      %p65 = scmp.ne.s32.totalorder %s53, %s54
      %p66 = scmp.eq.s32.totalorder %s23, 1
      %p67 = por %p65, %p66
      %p69 = scmp.ne.s32.totalorder %s54, %s68
      %p70 = scmp.eq.s32.totalorder %s23, 0
      %p71 = por %p69, %p70
      %s73 = sadd.s32 %s72, 1
      %p76 = scmp.eq.s32.totalorder %s17, 1
      %p77 = scmp.ne.s32.totalorder %s72, %s74
      %p78 = scmp.eq.s32.totalorder %s17, 0
      %p79 = por %p77, %p78
      %p80 = scmp.ne.s32.totalorder %s72, %s74
      %p81 = scmp.eq.s32.totalorder %s22, 1
      %p82 = por %p80, %p81
      %p83 = scmp.ne.s32.totalorder %s74, %s75
      %p84 = scmp.eq.s32.totalorder %s22, 0
      %p85 = por %p83, %p84
      %p86 = scmp.ne.s32.totalorder %s74, %s75
      %p87 = scmp.eq.s32.totalorder %s23, 1
      %p88 = por %p86, %p87
      %p90 = scmp.ne.s32.totalorder %s75, %s89
      %p91 = scmp.eq.s32.totalorder %s23, 0
      %p92 = por %p90, %p91
      %s94 = sadd.s32 %s93, 1
      %p97 = scmp.eq.s32.totalorder %s17, 1
      %p98 = scmp.ne.s32.totalorder %s93, %s95
      %p99 = scmp.eq.s32.totalorder %s17, 0
      %p100 = por %p98, %p99
      %p101 = scmp.ne.s32.totalorder %s93, %s95
      %p102 = scmp.eq.s32.totalorder %s22, 1
      %p103 = por %p101, %p102
      %p104 = scmp.ne.s32.totalorder %s95, %s96
      %p105 = scmp.eq.s32.totalorder %s22, 0
      %p106 = por %p104, %p105
      %p107 = scmp.ne.s32.totalorder %s95, %s96
      %p108 = scmp.eq.s32.totalorder %s23, 1
      %p109 = por %p107, %p108
      %p111 = scmp.ne.s32.totalorder %s96, %s110
      %p112 = scmp.eq.s32.totalorder %s23, 0
      %p113 = por %p111, %p112
      %s114 = ssub.s32 %s17, %s24
      %p115 = scmp.eq.s32.totalorder %s114, 0
      %s117 = sadd.s32 %s116, 1
      %s118 = scalar_select %p115, %s116, %s117
      %p121 = pneg %p115
      %p122 = scmp.eq.s32.totalorder %s17, 1
      %p123 = por %p121, %p122
      %p124 = scmp.ne.s32.totalorder %s116, %s119
      %p125 = scmp.eq.s32.totalorder %s17, 0
      %p126 = por %p124, %p125
      %p127 = scmp.ne.s32.totalorder %s116, %s119
      %p128 = scmp.eq.s32.totalorder %s22, 1
      %p129 = por %p127, %p128
      %p130 = scmp.ne.s32.totalorder %s119, %s120
      %p131 = scmp.eq.s32.totalorder %s22, 0
      %p132 = por %p130, %p131
      %p133 = scmp.ne.s32.totalorder %s119, %s120
      %p134 = scmp.eq.s32.totalorder %s23, 1
      %p135 = por %p133, %p134
      %p137 = scmp.ne.s32.totalorder %s120, %s136
      %p138 = scmp.eq.s32.totalorder %s23, 0
      %p139 = por %p137, %p138
      %p140 = scmp.le.s32.totalorder 1, %s17
      %p141 = scmp.lt.s32.totalorder %s17, 3
      %p142 = pnand %p140, %p141
      %p143 = pneg %p142
      // Predicated region
      $region9: #{tpu_custom_call.1} parent=5 // pred_check
        _
      $region10: #{tpu_custom_call.1} parent=5 // pred_check_branch
        %145 = sbr.rel (%p142) target = $region12
      $region11: #{tpu_custom_call.1} parent=5 // pred_region
        %s146 = ssub.s32 %s17, 1
        // Predicated region
        $region13: #{tpu_custom_call.1} parent=11 // pred_check
          %p147 = pneg %p64
        $region14: #{tpu_custom_call.1} parent=11 // pred_check_branch
          %149 = sbr.rel (%p147) target = $region16
        $region15: #{tpu_custom_call.1} parent=11 // pred_region
          %s151 = ssub.s32 512, 512
          %152 = vsyncadd [#allocation6], %s151
          %s153 = sshll.u32 [#allocation5], 4
          %s154 = int_to_ptr.vmem [resolvable:$true] %s153
          %159 = dma.hbm_to_vmem [thread:$0]  %s1, 512, %s154, [#allocation6], 128, 128, 8
        $region16: #{tpu_custom_call.1} parent=11 // pred_fallthru
          _
        // Predicated region
        $region17: #{tpu_custom_call.1} parent=11 // pred_check
          %p160 = pneg %p85
        $region18: #{tpu_custom_call.1} parent=11 // pred_check_branch
          %162 = sbr.rel (%p160) target = $region20
        $region19: #{tpu_custom_call.1} parent=11 // pred_region
          _
        $region20: #{tpu_custom_call.1} parent=11 // pred_fallthru
          _
        // Predicated region
        $region21: #{tpu_custom_call.1} parent=11 // pred_check
          %p163 = pneg %p106
        $region22: #{tpu_custom_call.1} parent=11 // pred_check_branch
          %165 = sbr.rel (%p163) target = $region24
        $region23: #{tpu_custom_call.1} parent=11 // pred_region
          _
        $region24: #{tpu_custom_call.1} parent=11 // pred_fallthru
          _
      $region12: #{tpu_custom_call.1} parent=5 // pred_fallthru
        _
      %p166 = scmp.lt.s32.totalorder %s17, 2
      // Predicated region
      $region25: #{tpu_custom_call.1} parent=5 // pred_check
        %p167 = pneg %p166
      $region26: #{tpu_custom_call.1} parent=5 // pred_check_branch
        %169 = sbr.rel (%p167) target = $region28
      $region27: #{tpu_custom_call.1} parent=5 // pred_region
        // Predicated region
        $region29: #{tpu_custom_call.1} parent=27 // pred_check
          %p170 = pneg %p37
        $region30: #{tpu_custom_call.1} parent=27 // pred_check_branch
          %172 = sbr.rel (%p170) target = $region32
        $region31: #{tpu_custom_call.1} parent=27 // pred_region
          %s173 = sand.u32 %s27, 1
          %s174 = scalar_lea.sflag [#allocation3], %s173
          %s175 = sand.u32 %s27, 1
          %s176 = smul.addr %s175, 128
          %s177 = scalar_lea.vmem [#allocation2], %s176
          %s178 = smul.u32 16, %s17
          %s180 = ssub.s32 2048, 2048
          %181 = vsyncadd %s174, %s180
          %s182 = smul.addr %s178, 128
          %s183 = scalar_lea.hbm %s0, %s182
          %s184 = sshll.u32 %s177, 4
          %s185 = int_to_ptr.vmem [resolvable:$true] %s184
          %190 = dma.hbm_to_vmem [thread:$0]  %s183, 2048, %s185, %s174, 128, 128, 8
        $region32: #{tpu_custom_call.1} parent=27 // pred_fallthru
          _
      $region28: #{tpu_custom_call.1} parent=5 // pred_fallthru
        _
      %p191 = scmp.le.s32.totalorder 1, %s17
      %p192 = scmp.lt.s32.totalorder %s17, 3
      %p193 = pnand %p191, %p192
      %p194 = pneg %p193
      // Predicated region
      $region33: #{tpu_custom_call.1} parent=5 // pred_check
        _
      $region34: #{tpu_custom_call.1} parent=5 // pred_check_branch
        %196 = sbr.rel (%p193) target = $region36
      $region35: #{tpu_custom_call.1} parent=5 // pred_region
        %s197 = ssub.s32 %s17, 1
        %s198 = sand.u32 %s30, 1
        %s199 = scalar_lea.sflag [#allocation3], %s198
        %s200 = sand.u32 %s30, 1
        %s201 = smul.addr %s200, 128
        %s202 = scalar_lea.vmem [#allocation2], %s201
        // Predicated region
        $region37: #{tpu_custom_call.1} parent=35 // pred_check
          %p203 = pneg %p43
        $region38: #{tpu_custom_call.1} parent=35 // pred_check_branch
          %205 = sbr.rel (%p203) target = $region40
        $region39: #{tpu_custom_call.1} parent=35 // pred_region
          %206 = dma.done %s199, 2048
        $region40: #{tpu_custom_call.1} parent=35 // pred_fallthru
          _
        // Predicated region
        $region41: #{tpu_custom_call.1} parent=35 // pred_check
          %p207 = pneg %p64
        $region42: #{tpu_custom_call.1} parent=35 // pred_check_branch
          %209 = sbr.rel (%p207) target = $region44
        $region43: #{tpu_custom_call.1} parent=35 // pred_region
          %210 = dma.done [#allocation6], 512
        $region44: #{tpu_custom_call.1} parent=35 // pred_fallthru
          _
        %s211 = sand.u32 %s30, 1
        %s212 = scalar_lea.sflag [#allocation3], %s211
        %s213 = sand.u32 %s30, 1
        %s214 = smul.addr %s213, 128
        %s215 = scalar_lea.vmem [#allocation2], %s214
        %p216 = pneg %p43
        %p217 = pneg %p40
        %p218 = pneg %p64
        %p219 = pneg %p61
        %p220 = pneg %p85
        %p221 = pneg %p82
        %p222 = pneg %p106
        %p223 = pneg %p103
        %p224 = pneg %p132
        %p225 = pneg %p129
        %s226 = sand.u32 %s119, 1
        %s227 = scalar_lea.sflag [#allocation4], %s226
        %s228 = sand.u32 %s119, 1
        %s229 = smul.addr %s228, 16
        %s230 = scalar_lea.vmem [#allocation7], %s229
        %s231 = smul.u32 16, %s22
        %s232 = smul.u32 2, %s22
        %v233 = vld [vmem:[%s202] sm:$0xff]
        %v234 = vld [vmem:[%s202 + $0x8] sm:$0xff]
        %v235 = vld [vmem:[%s202 + $0x10] sm:$0xff]
        %v236 = vld [vmem:[%s202 + $0x18] sm:$0xff]
        %v237 = vld [vmem:[%s202 + $0x20] sm:$0xff]
        %v238 = vld [vmem:[%s202 + $0x28] sm:$0xff]
        %v239 = vld [vmem:[%s202 + $0x30] sm:$0xff]
        %v240 = vld [vmem:[%s202 + $0x38] sm:$0xff]
        %v241 = vld [vmem:[%s202 + $0x40] sm:$0xff]
        %v242 = vld [vmem:[%s202 + $0x48] sm:$0xff]
        %v243 = vld [vmem:[%s202 + $0x50] sm:$0xff]
        %v244 = vld [vmem:[%s202 + $0x58] sm:$0xff]
        %v245 = vld [vmem:[%s202 + $0x60] sm:$0xff]
        %v246 = vld [vmem:[%s202 + $0x68] sm:$0xff]
        %v247 = vld [vmem:[%s202 + $0x70] sm:$0xff]
        %v248 = vld [vmem:[%s202 + $0x78] sm:$0xff]
        %v249 = vld [vmem:[#allocation5] sm:$0xff]
        %v250 = vld [vmem:[#allocation5 + $0x8] sm:$0xff]
        %v251 = vld [vmem:[#allocation5 + $0x10] sm:$0xff]
        %v252 = vld [vmem:[#allocation5 + $0x18] sm:$0xff]
        %v253 = vld [vmem:[%s2] sm:$0x1]
        %v255 = vlaneseq
        %v256 = vshrl.u32 %v255, 7
        %v257 = vsub.s32 0, %v256
        %v258 = vrot.slane %v253, %v257
        %vm260 = vcmask 261120
        %v262 = vsel %vm260, %v233, 0
        %v265 = vsel %vm260, %v234, 0
        %v268 = vsel %vm260, %v235, 0
        %v271 = vsel %vm260, %v236, 0
        %v274 = vsel %vm260, %v237, 0
        %v277 = vsel %vm260, %v238, 0
        %v280 = vsel %vm260, %v239, 0
        %v283 = vsel %vm260, %v240, 0
        %v286 = vsel %vm260, %v241, 0
        %v289 = vsel %vm260, %v242, 0
        %v292 = vsel %vm260, %v243, 0
        %v295 = vsel %vm260, %v244, 0
        %v298 = vsel %vm260, %v245, 0
        %v301 = vsel %vm260, %v246, 0
        %v304 = vsel %vm260, %v247, 0
        %v307 = vsel %vm260, %v248, 0
        %309 = vmatprep.subr.mxu0 0.0
        %310 = vmatpush1.msra.mxu0 0.0
        %311 = vmatprep.subr.mxu0 0.0
        %312 = vmatpush1.msra.mxu0 0.0
        %313 = vmatprep.subr.mxu0 0.0
        %314 = vmatpush1.msra.mxu0 0.0
        %315 = vmatprep.subr.mxu0 0.0
        %316 = vmatpush1.msra.mxu0 0.0
        %317 = vmatprep.subr.mxu0 0.0
        %318 = vmatpush1.msra.mxu0 0.0
        %319 = vmatprep.subr.mxu0 0.0
        %320 = vmatpush1.msra.mxu0 0.0
        %321 = vmatprep.subr.mxu0 0.0
        %322 = vmatpush1.msra.mxu0 0.0
        %323 = vmatprep.subr.mxu0 0.0
        %324 = vmatpush1.msra.mxu0 0.0
        %325 = vmatprep.subr.mxu0 0.0
        %326 = vmatpush1.msra.mxu0 0.0
        %327 = vmatprep.subr.mxu0 0.0
        %328 = vmatpush1.msra.mxu0 0.0
        %329 = vmatprep.subr.mxu0 0.0
        %330 = vmatpush1.msra.mxu0 0.0
        %331 = vmatprep.subr.mxu0 0.0
        %332 = vmatpush1.msra.mxu0 0.0
        %333 = vmatprep.subr.mxu0 0.0
        %334 = vmatpush1.msra.mxu0 %v252
        %335 = vmatprep.subr.mxu0 0.0
        %336 = vmatpush1.msra.mxu0 %v251
        %337 = vmatprep.subr.mxu0 0.0
        %338 = vmatpush1.msra.mxu0 %v250
        %339 = vmatprep.subr.mxu0 0.0
        %340 = vmatpush1.msra.mxu0 %v249
        %341 = vmatprep.subr.mxu0 0.0
        %342 = vmatpush2.msra.mxu0 0.0
        %343 = vmatprep.subr.mxu0 0.0
        %344 = vmatpush2.msra.mxu0 0.0
        %345 = vmatprep.subr.mxu0 0.0
        %346 = vmatpush2.msra.mxu0 0.0
        %347 = vmatprep.subr.mxu0 0.0
        %348 = vmatpush2.msra.mxu0 0.0
        %349 = vmatprep.subr.mxu0 0.0
        %350 = vmatpush2.msra.mxu0 0.0
        %351 = vmatprep.subr.mxu0 0.0
        %352 = vmatpush2.msra.mxu0 0.0
        %353 = vmatprep.subr.mxu0 0.0
        %354 = vmatpush2.msra.mxu0 0.0
        %355 = vmatprep.subr.mxu0 0.0
        %356 = vmatpush2.msra.mxu0 0.0
        %357 = vmatprep.subr.mxu0 0.0
        %358 = vmatpush2.msra.mxu0 0.0
        %359 = vmatprep.subr.mxu0 0.0
        %360 = vmatpush2.msra.mxu0 0.0
        %361 = vmatprep.subr.mxu0 0.0
        %362 = vmatpush2.msra.mxu0 0.0
        %363 = vmatprep.subr.mxu0 0.0
        %364 = vmatpush2.msra.mxu0 0.0
        %365 = vmatprep.subr.mxu0 0.0
        %366 = vmatpush2.msra.mxu0 0.0
        %367 = vmatprep.subr.mxu0 0.0
        %368 = vmatpush2.msra.mxu0 0.0
        %369 = vmatprep.subr.mxu0 0.0
        %370 = vmatpush2.msra.mxu0 0.0
        %371 = vmatprep.subr.mxu0 0.0
        %372 = vmatpush2.msra.mxu0 0.0
        %373 = vmatprep.mubr.f32.mxu0 0.0
        %374 = vmatmul.mubr.f32.gmra.mxu0 %v262
        %v375 = vpop.f32.mrf.mxu0
        %v376 = vadd.f32 %v258, %v375
        %v377 = vpop.f32.mrf.mxu0
        %378 = vmatprep.mubr.f32.mxu0 0.0
        %379 = vmatmul.mubr.f32.gmra.mxu0 %v265
        %v380 = vpop.f32.mrf.mxu0
        %v381 = vadd.f32 %v258, %v380
        %v382 = vpop.f32.mrf.mxu0
        %383 = vmatprep.mubr.f32.mxu0 0.0
        %384 = vmatmul.mubr.f32.gmra.mxu0 %v268
        %v385 = vpop.f32.mrf.mxu0
        %v386 = vadd.f32 %v258, %v385
        %v387 = vpop.f32.mrf.mxu0
        %388 = vmatprep.mubr.f32.mxu0 0.0
        %389 = vmatmul.mubr.f32.gmra.mxu0 %v271
        %v390 = vpop.f32.mrf.mxu0
        %v391 = vadd.f32 %v258, %v390
        %v392 = vpop.f32.mrf.mxu0
        %393 = vmatprep.mubr.f32.mxu0 0.0
        %394 = vmatmul.mubr.f32.gmra.mxu0 %v274
        %v395 = vpop.f32.mrf.mxu0
        %v396 = vadd.f32 %v258, %v395
        %v397 = vpop.f32.mrf.mxu0
        %398 = vmatprep.mubr.f32.mxu0 0.0
        %399 = vmatmul.mubr.f32.gmra.mxu0 %v277
        %v400 = vpop.f32.mrf.mxu0
        %v401 = vadd.f32 %v258, %v400
        %v402 = vpop.f32.mrf.mxu0
        %403 = vmatprep.mubr.f32.mxu0 0.0
        %404 = vmatmul.mubr.f32.gmra.mxu0 %v280
        %v405 = vpop.f32.mrf.mxu0
        %v406 = vadd.f32 %v258, %v405
        %v407 = vpop.f32.mrf.mxu0
        %408 = vmatprep.mubr.f32.mxu0 0.0
        %409 = vmatmul.mubr.f32.gmra.mxu0 %v283
        %v410 = vpop.f32.mrf.mxu0
        %v411 = vadd.f32 %v258, %v410
        %v412 = vpop.f32.mrf.mxu0
        %413 = vmatprep.mubr.f32.mxu0 0.0
        %414 = vmatmul.mubr.f32.gmra.mxu0 %v286
        %v415 = vpop.f32.mrf.mxu0
        %v416 = vadd.f32 %v258, %v415
        %v417 = vpop.f32.mrf.mxu0
        %418 = vmatprep.mubr.f32.mxu0 0.0
        %419 = vmatmul.mubr.f32.gmra.mxu0 %v289
        %v420 = vpop.f32.mrf.mxu0
        %v421 = vadd.f32 %v258, %v420
        %v422 = vpop.f32.mrf.mxu0
        %423 = vmatprep.mubr.f32.mxu0 0.0
        %424 = vmatmul.mubr.f32.gmra.mxu0 %v292
        %v425 = vpop.f32.mrf.mxu0
        %v426 = vadd.f32 %v258, %v425
        %v427 = vpop.f32.mrf.mxu0
        %428 = vmatprep.mubr.f32.mxu0 0.0
        %429 = vmatmul.mubr.f32.gmra.mxu0 %v295
        %v430 = vpop.f32.mrf.mxu0
        %v431 = vadd.f32 %v258, %v430
        %v432 = vpop.f32.mrf.mxu0
        %433 = vmatprep.mubr.f32.mxu0 0.0
        %434 = vmatmul.mubr.f32.gmra.mxu0 %v298
        %v435 = vpop.f32.mrf.mxu0
        %v436 = vadd.f32 %v258, %v435
        %v437 = vpop.f32.mrf.mxu0
        %438 = vmatprep.mubr.f32.mxu0 0.0
        %439 = vmatmul.mubr.f32.gmra.mxu0 %v301
        %v440 = vpop.f32.mrf.mxu0
        %v441 = vadd.f32 %v258, %v440
        %v442 = vpop.f32.mrf.mxu0
        %443 = vmatprep.mubr.f32.mxu0 0.0
        %444 = vmatmul.mubr.f32.gmra.mxu0 %v304
        %v445 = vpop.f32.mrf.mxu0
        %v446 = vadd.f32 %v258, %v445
        %v447 = vpop.f32.mrf.mxu0
        %448 = vmatprep.mubr.f32.mxu0 0.0
        %449 = vmatmul.mubr.f32.gmra.mxu0 %v307
        %v450 = vpop.f32.mrf.mxu0
        %v451 = vadd.f32 %v258, %v450
        %v452 = vpop.f32.mrf.mxu0
        %453 = vdwg.mxu0
        %v454 = vtanh.pop %v376
        %v455 = vtanh.pop %v381
        %v456 = vtanh.pop %v386
        %v457 = vtanh.pop %v391
        %v458 = vtanh.pop %v396
        %v459 = vtanh.pop %v401
        %v460 = vtanh.pop %v406
        %v461 = vtanh.pop %v411
        %v462 = vtanh.pop %v416
        %v463 = vtanh.pop %v421
        %v464 = vtanh.pop %v426
        %v465 = vtanh.pop %v431
        %v466 = vtanh.pop %v436
        %v467 = vtanh.pop %v441
        %v468 = vtanh.pop %v446
        %v469 = vtanh.pop %v451
        %v470 = vld [vmem:[%s3] sm:$0x1]
        %v472 = vlaneseq
        %v473 = vshrl.u32 %v472, 7
        %v474 = vsub.s32 0, %v473
        %v475 = vrot.slane %v470, %v474
        %v477 = vmul.f32 %v454, %v475
        %v478 = vmul.f32 %v455, %v475
        %v479 = vmul.f32 %v456, %v475
        %v480 = vmul.f32 %v457, %v475
        %v481 = vmul.f32 %v458, %v475
        %v482 = vmul.f32 %v459, %v475
        %v483 = vmul.f32 %v460, %v475
        %v484 = vmul.f32 %v461, %v475
        %v485 = vmul.f32 %v462, %v475
        %v486 = vmul.f32 %v463, %v475
        %v487 = vmul.f32 %v464, %v475
        %v488 = vmul.f32 %v465, %v475
        %v489 = vmul.f32 %v466, %v475
        %v490 = vmul.f32 %v467, %v475
        %v491 = vmul.f32 %v468, %v475
        %v492 = vmul.f32 %v469, %v475
        %493 = vadd.xlane.f32.xlu0 %v477
        %v494 = vpop.xlane.xlu0 %493
        %495 = vadd.xlane.f32.xlu0 %v478
        %v496 = vpop.xlane.xlu0 %495
        %497 = vadd.xlane.f32.xlu0 %v479
        %v498 = vpop.xlane.xlu0 %497
        %499 = vadd.xlane.f32.xlu0 %v480
        %v500 = vpop.xlane.xlu0 %499
        %501 = vadd.xlane.f32.xlu0 %v481
        %v502 = vpop.xlane.xlu0 %501
        %503 = vadd.xlane.f32.xlu0 %v482
        %v504 = vpop.xlane.xlu0 %503
        %505 = vadd.xlane.f32.xlu0 %v483
        %v506 = vpop.xlane.xlu0 %505
        %507 = vadd.xlane.f32.xlu0 %v484
        %v508 = vpop.xlane.xlu0 %507
        %509 = vadd.xlane.f32.xlu0 %v485
        %v510 = vpop.xlane.xlu0 %509
        %511 = vadd.xlane.f32.xlu0 %v486
        %v512 = vpop.xlane.xlu0 %511
        %513 = vadd.xlane.f32.xlu0 %v487
        %v514 = vpop.xlane.xlu0 %513
        %515 = vadd.xlane.f32.xlu0 %v488
        %v516 = vpop.xlane.xlu0 %515
        %517 = vadd.xlane.f32.xlu0 %v489
        %v518 = vpop.xlane.xlu0 %517
        %519 = vadd.xlane.f32.xlu0 %v490
        %v520 = vpop.xlane.xlu0 %519
        %521 = vadd.xlane.f32.xlu0 %v491
        %v522 = vpop.xlane.xlu0 %521
        %523 = vadd.xlane.f32.xlu0 %v492
        %v524 = vpop.xlane.xlu0 %523
        %v541 = vlaneseq
        %v542 = vand.u32 %v541, 127
        %v543 = vlaneseq
        %v544 = vshrl.u32 %v543, 7
        %v545 = vsub.s32 %v542, %v544
        %v546 = vrot.slane %v494, %v545
        %v547 = vlaneseq
        %v548 = vshrl.u32 %v547, 7
        %v549 = vsub.s32 %v542, %v548
        %v550 = vrot.slane %v496, %v549
        %v551 = vlaneseq
        %v552 = vshrl.u32 %v551, 7
        %v553 = vsub.s32 %v542, %v552
        %v554 = vrot.slane %v498, %v553
        %v555 = vlaneseq
        %v556 = vshrl.u32 %v555, 7
        %v557 = vsub.s32 %v542, %v556
        %v558 = vrot.slane %v500, %v557
        %v559 = vlaneseq
        %v560 = vshrl.u32 %v559, 7
        %v561 = vsub.s32 %v542, %v560
        %v562 = vrot.slane %v502, %v561
        %v563 = vlaneseq
        %v564 = vshrl.u32 %v563, 7
        %v565 = vsub.s32 %v542, %v564
        %v566 = vrot.slane %v504, %v565
        %v567 = vlaneseq
        %v568 = vshrl.u32 %v567, 7
        %v569 = vsub.s32 %v542, %v568
        %v570 = vrot.slane %v506, %v569
        %v571 = vlaneseq
        %v572 = vshrl.u32 %v571, 7
        %v573 = vsub.s32 %v542, %v572
        %v574 = vrot.slane %v508, %v573
        %v575 = vlaneseq
        %v576 = vshrl.u32 %v575, 7
        %v577 = vsub.s32 %v542, %v576
        %v578 = vrot.slane %v510, %v577
        %v579 = vlaneseq
        %v580 = vshrl.u32 %v579, 7
        %v581 = vsub.s32 %v542, %v580
        %v582 = vrot.slane %v512, %v581
        %v583 = vlaneseq
        %v584 = vshrl.u32 %v583, 7
        %v585 = vsub.s32 %v542, %v584
        %v586 = vrot.slane %v514, %v585
        %v587 = vlaneseq
        %v588 = vshrl.u32 %v587, 7
        %v589 = vsub.s32 %v542, %v588
        %v590 = vrot.slane %v516, %v589
        %v591 = vlaneseq
        %v592 = vshrl.u32 %v591, 7
        %v593 = vsub.s32 %v542, %v592
        %v594 = vrot.slane %v518, %v593
        %v595 = vlaneseq
        %v596 = vshrl.u32 %v595, 7
        %v597 = vsub.s32 %v542, %v596
        %v598 = vrot.slane %v520, %v597
        %v599 = vlaneseq
        %v600 = vshrl.u32 %v599, 7
        %v601 = vsub.s32 %v542, %v600
        %v602 = vrot.slane %v522, %v601
        %v603 = vlaneseq
        %v604 = vshrl.u32 %v603, 7
        %v605 = vsub.s32 %v542, %v604
        %v606 = vrot.slane %v524, %v605
        %vm607 = vcmask 1041409
        %v608 = vsel %vm607, %v550, %v546
        %vm609 = vcmask 1042434
        %v610 = vsel %vm609, %v554, %v608
        %vm611 = vcmask 1043459
        %v612 = vsel %vm611, %v558, %v610
        %vm613 = vcmask 1044484
        %v614 = vsel %vm613, %v562, %v612
        %vm615 = vcmask 1045509
        %v616 = vsel %vm615, %v566, %v614
        %vm617 = vcmask 1046534
        %v618 = vsel %vm617, %v570, %v616
        %vm619 = vcmask 1047559
        %v620 = vsel %vm619, %v574, %v618
        %v621 = vsel %vm607, %v582, %v578
        %v622 = vsel %vm609, %v586, %v621
        %v623 = vsel %vm611, %v590, %v622
        %v624 = vsel %vm613, %v594, %v623
        %v625 = vsel %vm615, %v598, %v624
        %v626 = vsel %vm617, %v602, %v625
        %v627 = vsel %vm619, %v606, %v626
        %vm630 = vcmask 64512
        %v631 = vsel %vm630, %v620, -inf
        %632 = vmax.xlane.f32.xlu0 %v631
        %v633 = vpop.xlane.xlu0 %632
        %v634 = vsel %vm630, %v627, -inf
        %635 = vmax.xlane.f32.xlu0 %v634
        %v636 = vpop.xlane.xlu0 %635
        %v639 = vlaneseq
        %v640 = vshrl.u32 %v639, 7
        %v641 = vsub.s32 0, %v640
        %v642 = vrot.slane %v633, %v641
        %v643 = vlaneseq
        %v644 = vshrl.u32 %v643, 7
        %v645 = vsub.s32 1, %v644
        %v646 = vrot.slane %v633, %v645
        %v647 = vlaneseq
        %v648 = vshrl.u32 %v647, 7
        %v649 = vsub.s32 2, %v648
        %v650 = vrot.slane %v633, %v649
        %v651 = vlaneseq
        %v652 = vshrl.u32 %v651, 7
        %v653 = vsub.s32 3, %v652
        %v654 = vrot.slane %v633, %v653
        %v655 = vlaneseq
        %v656 = vshrl.u32 %v655, 7
        %v657 = vsub.s32 4, %v656
        %v658 = vrot.slane %v633, %v657
        %v659 = vlaneseq
        %v660 = vshrl.u32 %v659, 7
        %v661 = vsub.s32 5, %v660
        %v662 = vrot.slane %v633, %v661
        %v663 = vlaneseq
        %v664 = vshrl.u32 %v663, 7
        %v665 = vsub.s32 6, %v664
        %v666 = vrot.slane %v633, %v665
        %v667 = vlaneseq
        %v668 = vshrl.u32 %v667, 7
        %v669 = vsub.s32 7, %v668
        %v670 = vrot.slane %v633, %v669
        %v671 = vlaneseq
        %v672 = vshrl.u32 %v671, 7
        %v673 = vsub.s32 0, %v672
        %v674 = vrot.slane %v636, %v673
        %v675 = vlaneseq
        %v676 = vshrl.u32 %v675, 7
        %v677 = vsub.s32 1, %v676
        %v678 = vrot.slane %v636, %v677
        %v679 = vlaneseq
        %v680 = vshrl.u32 %v679, 7
        %v681 = vsub.s32 2, %v680
        %v682 = vrot.slane %v636, %v681
        %v683 = vlaneseq
        %v684 = vshrl.u32 %v683, 7
        %v685 = vsub.s32 3, %v684
        %v686 = vrot.slane %v636, %v685
        %v687 = vlaneseq
        %v688 = vshrl.u32 %v687, 7
        %v689 = vsub.s32 4, %v688
        %v690 = vrot.slane %v636, %v689
        %v691 = vlaneseq
        %v692 = vshrl.u32 %v691, 7
        %v693 = vsub.s32 5, %v692
        %v694 = vrot.slane %v636, %v693
        %v695 = vlaneseq
        %v696 = vshrl.u32 %v695, 7
        %v697 = vsub.s32 6, %v696
        %v698 = vrot.slane %v636, %v697
        %v699 = vlaneseq
        %v700 = vshrl.u32 %v699, 7
        %v701 = vsub.s32 7, %v700
        %v702 = vrot.slane %v636, %v701
        %v719 = vsub.f32 %v494, %v642
        %v720 = vsub.f32 %v496, %v646
        %v721 = vsub.f32 %v498, %v650
        %v722 = vsub.f32 %v500, %v654
        %v723 = vsub.f32 %v502, %v658
        %v724 = vsub.f32 %v504, %v662
        %v725 = vsub.f32 %v506, %v666
        %v726 = vsub.f32 %v508, %v670
        %v727 = vsub.f32 %v510, %v674
        %v728 = vsub.f32 %v512, %v678
        %v729 = vsub.f32 %v514, %v682
        %v730 = vsub.f32 %v516, %v686
        %v731 = vsub.f32 %v518, %v690
        %v732 = vsub.f32 %v520, %v694
        %v733 = vsub.f32 %v522, %v698
        %v734 = vsub.f32 %v524, %v702
        %v735 = vmul.f32 %v719, 1.442695
        %v736 = vpow.pop %v735
        %v737 = vmul.f32 %v720, 1.442695
        %v738 = vpow.pop %v737
        %v739 = vmul.f32 %v721, 1.442695
        %v740 = vpow.pop %v739
        %v741 = vmul.f32 %v722, 1.442695
        %v742 = vpow.pop %v741
        %v743 = vmul.f32 %v723, 1.442695
        %v744 = vpow.pop %v743
        %v745 = vmul.f32 %v724, 1.442695
        %v746 = vpow.pop %v745
        %v747 = vmul.f32 %v725, 1.442695
        %v748 = vpow.pop %v747
        %v749 = vmul.f32 %v726, 1.442695
        %v750 = vpow.pop %v749
        %v751 = vmul.f32 %v727, 1.442695
        %v752 = vpow.pop %v751
        %v753 = vmul.f32 %v728, 1.442695
        %v754 = vpow.pop %v753
        %v755 = vmul.f32 %v729, 1.442695
        %v756 = vpow.pop %v755
        %v757 = vmul.f32 %v730, 1.442695
        %v758 = vpow.pop %v757
        %v759 = vmul.f32 %v731, 1.442695
        %v760 = vpow.pop %v759
        %v761 = vmul.f32 %v732, 1.442695
        %v762 = vpow.pop %v761
        %v763 = vmul.f32 %v733, 1.442695
        %v764 = vpow.pop %v763
        %v765 = vmul.f32 %v734, 1.442695
        %v766 = vpow.pop %v765
        %783 = vset.pattern.permute.xlu0 0
        %784 = vperm.xlu0 %783, %v736
        %v785 = vpop.permute.xlu0 %784
        %786 = vset.pattern.permute.xlu0 0
        %787 = vperm.xlu0 %786, %v738
        %v788 = vpop.permute.xlu0 %787
        %789 = vset.pattern.permute.xlu0 0
        %790 = vperm.xlu0 %789, %v740
        %v791 = vpop.permute.xlu0 %790
        %792 = vset.pattern.permute.xlu0 0
        %793 = vperm.xlu0 %792, %v742
        %v794 = vpop.permute.xlu0 %793
        %795 = vset.pattern.permute.xlu0 0
        %796 = vperm.xlu0 %795, %v744
        %v797 = vpop.permute.xlu0 %796
        %798 = vset.pattern.permute.xlu0 0
        %799 = vperm.xlu0 %798, %v746
        %v800 = vpop.permute.xlu0 %799
        %801 = vset.pattern.permute.xlu0 0
        %802 = vperm.xlu0 %801, %v748
        %v803 = vpop.permute.xlu0 %802
        %804 = vset.pattern.permute.xlu0 0
        %805 = vperm.xlu0 %804, %v750
        %v806 = vpop.permute.xlu0 %805
        %807 = vset.pattern.permute.xlu0 0
        %808 = vperm.xlu0 %807, %v752
        %v809 = vpop.permute.xlu0 %808
        %810 = vset.pattern.permute.xlu0 0
        %811 = vperm.xlu0 %810, %v754
        %v812 = vpop.permute.xlu0 %811
        %813 = vset.pattern.permute.xlu0 0
        %814 = vperm.xlu0 %813, %v756
        %v815 = vpop.permute.xlu0 %814
        %816 = vset.pattern.permute.xlu0 0
        %817 = vperm.xlu0 %816, %v758
        %v818 = vpop.permute.xlu0 %817
        %819 = vset.pattern.permute.xlu0 0
        %820 = vperm.xlu0 %819, %v760
        %v821 = vpop.permute.xlu0 %820
        %822 = vset.pattern.permute.xlu0 0
        %823 = vperm.xlu0 %822, %v762
        %v824 = vpop.permute.xlu0 %823
        %825 = vset.pattern.permute.xlu0 0
        %826 = vperm.xlu0 %825, %v764
        %v827 = vpop.permute.xlu0 %826
        %828 = vset.pattern.permute.xlu0 0
        %829 = vperm.xlu0 %828, %v766
        %v830 = vpop.permute.xlu0 %829
        %v831 = vlaneseq
        %v832 = vshrl.u32 %v831, 7
        %v833 = vsub.s32 %v542, %v832
        %v834 = vrot.slane %v785, %v833
        %v835 = vlaneseq
        %v836 = vshrl.u32 %v835, 7
        %v837 = vsub.s32 %v542, %v836
        %v838 = vrot.slane %v788, %v837
        %v839 = vlaneseq
        %v840 = vshrl.u32 %v839, 7
        %v841 = vsub.s32 %v542, %v840
        %v842 = vrot.slane %v791, %v841
        %v843 = vlaneseq
        %v844 = vshrl.u32 %v843, 7
        %v845 = vsub.s32 %v542, %v844
        %v846 = vrot.slane %v794, %v845
        %v847 = vlaneseq
        %v848 = vshrl.u32 %v847, 7
        %v849 = vsub.s32 %v542, %v848
        %v850 = vrot.slane %v797, %v849
        %v851 = vlaneseq
        %v852 = vshrl.u32 %v851, 7
        %v853 = vsub.s32 %v542, %v852
        %v854 = vrot.slane %v800, %v853
        %v855 = vlaneseq
        %v856 = vshrl.u32 %v855, 7
        %v857 = vsub.s32 %v542, %v856
        %v858 = vrot.slane %v803, %v857
        %v859 = vlaneseq
        %v860 = vshrl.u32 %v859, 7
        %v861 = vsub.s32 %v542, %v860
        %v862 = vrot.slane %v806, %v861
        %v863 = vlaneseq
        %v864 = vshrl.u32 %v863, 7
        %v865 = vsub.s32 %v542, %v864
        %v866 = vrot.slane %v809, %v865
        %v867 = vlaneseq
        %v868 = vshrl.u32 %v867, 7
        %v869 = vsub.s32 %v542, %v868
        %v870 = vrot.slane %v812, %v869
        %v871 = vlaneseq
        %v872 = vshrl.u32 %v871, 7
        %v873 = vsub.s32 %v542, %v872
        %v874 = vrot.slane %v815, %v873
        %v875 = vlaneseq
        %v876 = vshrl.u32 %v875, 7
        %v877 = vsub.s32 %v542, %v876
        %v878 = vrot.slane %v818, %v877
        %v879 = vlaneseq
        %v880 = vshrl.u32 %v879, 7
        %v881 = vsub.s32 %v542, %v880
        %v882 = vrot.slane %v821, %v881
        %v883 = vlaneseq
        %v884 = vshrl.u32 %v883, 7
        %v885 = vsub.s32 %v542, %v884
        %v886 = vrot.slane %v824, %v885
        %v887 = vlaneseq
        %v888 = vshrl.u32 %v887, 7
        %v889 = vsub.s32 %v542, %v888
        %v890 = vrot.slane %v827, %v889
        %v891 = vlaneseq
        %v892 = vshrl.u32 %v891, 7
        %v893 = vsub.s32 %v542, %v892
        %v894 = vrot.slane %v830, %v893
        %v895 = vsel %vm607, %v838, %v834
        %v896 = vsel %vm609, %v842, %v895
        %v897 = vsel %vm611, %v846, %v896
        %v898 = vsel %vm613, %v850, %v897
        %v899 = vsel %vm615, %v854, %v898
        %v900 = vsel %vm617, %v858, %v899
        %v901 = vsel %vm619, %v862, %v900
        %v902 = vsel %vm607, %v870, %v866
        %v903 = vsel %vm609, %v874, %v902
        %v904 = vsel %vm611, %v878, %v903
        %v905 = vsel %vm613, %v882, %v904
        %v906 = vsel %vm615, %v886, %v905
        %v907 = vsel %vm617, %v890, %v906
        %v908 = vsel %vm619, %v894, %v907
        %v911 = vsel %vm630, %v901, 0.0
        %912 = vadd.xlane.f32.xlu0 %v911
        %v913 = vpop.xlane.xlu0 %912
        %v914 = vsel %vm630, %v908, 0.0
        %915 = vadd.xlane.f32.xlu0 %v914
        %v916 = vpop.xlane.xlu0 %915
        %v917 = vrcp.pop %v913
        %v918 = vrcp.pop %v916
        %v921 = vlaneseq
        %v922 = vshrl.u32 %v921, 7
        %v923 = vsub.s32 0, %v922
        %v924 = vrot.slane %v917, %v923
        %v925 = vlaneseq
        %v926 = vshrl.u32 %v925, 7
        %v927 = vsub.s32 1, %v926
        %v928 = vrot.slane %v917, %v927
        %v929 = vlaneseq
        %v930 = vshrl.u32 %v929, 7
        %v931 = vsub.s32 2, %v930
        %v932 = vrot.slane %v917, %v931
        %v933 = vlaneseq
        %v934 = vshrl.u32 %v933, 7
        %v935 = vsub.s32 3, %v934
        %v936 = vrot.slane %v917, %v935
        %v937 = vlaneseq
        %v938 = vshrl.u32 %v937, 7
        %v939 = vsub.s32 4, %v938
        %v940 = vrot.slane %v917, %v939
        %v941 = vlaneseq
        %v942 = vshrl.u32 %v941, 7
        %v943 = vsub.s32 5, %v942
        %v944 = vrot.slane %v917, %v943
        %v945 = vlaneseq
        %v946 = vshrl.u32 %v945, 7
        %v947 = vsub.s32 6, %v946
        %v948 = vrot.slane %v917, %v947
        %v949 = vlaneseq
        %v950 = vshrl.u32 %v949, 7
        %v951 = vsub.s32 7, %v950
        %v952 = vrot.slane %v917, %v951
        %v953 = vlaneseq
        %v954 = vshrl.u32 %v953, 7
        %v955 = vsub.s32 0, %v954
        %v956 = vrot.slane %v918, %v955
        %v957 = vlaneseq
        %v958 = vshrl.u32 %v957, 7
        %v959 = vsub.s32 1, %v958
        %v960 = vrot.slane %v918, %v959
        %v961 = vlaneseq
        %v962 = vshrl.u32 %v961, 7
        %v963 = vsub.s32 2, %v962
        %v964 = vrot.slane %v918, %v963
        %v965 = vlaneseq
        %v966 = vshrl.u32 %v965, 7
        %v967 = vsub.s32 3, %v966
        %v968 = vrot.slane %v918, %v967
        %v969 = vlaneseq
        %v970 = vshrl.u32 %v969, 7
        %v971 = vsub.s32 4, %v970
        %v972 = vrot.slane %v918, %v971
        %v973 = vlaneseq
        %v974 = vshrl.u32 %v973, 7
        %v975 = vsub.s32 5, %v974
        %v976 = vrot.slane %v918, %v975
        %v977 = vlaneseq
        %v978 = vshrl.u32 %v977, 7
        %v979 = vsub.s32 6, %v978
        %v980 = vrot.slane %v918, %v979
        %v981 = vlaneseq
        %v982 = vshrl.u32 %v981, 7
        %v983 = vsub.s32 7, %v982
        %v984 = vrot.slane %v918, %v983
        %v1001 = vmul.f32 %v736, %v924
        %v1002 = vmul.f32 %v738, %v928
        %v1003 = vmul.f32 %v740, %v932
        %v1004 = vmul.f32 %v742, %v936
        %v1005 = vmul.f32 %v744, %v940
        %v1006 = vmul.f32 %v746, %v944
        %v1007 = vmul.f32 %v748, %v948
        %v1008 = vmul.f32 %v750, %v952
        %v1009 = vmul.f32 %v752, %v956
        %v1010 = vmul.f32 %v754, %v960
        %v1011 = vmul.f32 %v756, %v964
        %v1012 = vmul.f32 %v758, %v968
        %v1013 = vmul.f32 %v760, %v972
        %v1014 = vmul.f32 %v762, %v976
        %v1015 = vmul.f32 %v764, %v980
        %v1016 = vmul.f32 %v766, %v984
        %1018 = vset.pattern.permute.xlu0 0
        %1019 = vperm.xlu0 %1018, %v1001
        %v1020 = vpop.permute.xlu0 %1019
        %1023 = vset.pattern.permute.xlu0 0
        %1024 = vperm.xlu0 %1023, %v1002
        %v1025 = vpop.permute.xlu0 %1024
        %1028 = vset.pattern.permute.xlu0 0
        %1029 = vperm.xlu0 %1028, %v1003
        %v1030 = vpop.permute.xlu0 %1029
        %1033 = vset.pattern.permute.xlu0 0
        %1034 = vperm.xlu0 %1033, %v1004
        %v1035 = vpop.permute.xlu0 %1034
        %1038 = vset.pattern.permute.xlu0 0
        %1039 = vperm.xlu0 %1038, %v1005
        %v1040 = vpop.permute.xlu0 %1039
        %1043 = vset.pattern.permute.xlu0 0
        %1044 = vperm.xlu0 %1043, %v1006
        %v1045 = vpop.permute.xlu0 %1044
        %1048 = vset.pattern.permute.xlu0 0
        %1049 = vperm.xlu0 %1048, %v1007
        %v1050 = vpop.permute.xlu0 %1049
        %1053 = vset.pattern.permute.xlu0 0
        %1054 = vperm.xlu0 %1053, %v1008
        %v1055 = vpop.permute.xlu0 %1054
        %1058 = vset.pattern.permute.xlu0 0
        %1059 = vperm.xlu0 %1058, %v1009
        %v1060 = vpop.permute.xlu0 %1059
        %1063 = vset.pattern.permute.xlu0 0
        %1064 = vperm.xlu0 %1063, %v1010
        %v1065 = vpop.permute.xlu0 %1064
        %1068 = vset.pattern.permute.xlu0 0
        %1069 = vperm.xlu0 %1068, %v1011
        %v1070 = vpop.permute.xlu0 %1069
        %1073 = vset.pattern.permute.xlu0 0
        %1074 = vperm.xlu0 %1073, %v1012
        %v1075 = vpop.permute.xlu0 %1074
        %1078 = vset.pattern.permute.xlu0 0
        %1079 = vperm.xlu0 %1078, %v1013
        %v1080 = vpop.permute.xlu0 %1079
        %1083 = vset.pattern.permute.xlu0 0
        %1084 = vperm.xlu0 %1083, %v1014
        %v1085 = vpop.permute.xlu0 %1084
        %1088 = vset.pattern.permute.xlu0 0
        %1089 = vperm.xlu0 %1088, %v1015
        %v1090 = vpop.permute.xlu0 %1089
        %1093 = vset.pattern.permute.xlu0 0
        %1094 = vperm.xlu0 %1093, %v1016
        %v1095 = vpop.permute.xlu0 %1094
        %v1097 = vmul.f32 %v233, %v1020
        %v1098 = vmul.f32 %v234, %v1025
        %v1099 = vmul.f32 %v235, %v1030
        %v1100 = vmul.f32 %v236, %v1035
        %v1101 = vmul.f32 %v237, %v1040
        %v1102 = vmul.f32 %v238, %v1045
        %v1103 = vmul.f32 %v239, %v1050
        %v1104 = vmul.f32 %v240, %v1055
        %v1105 = vmul.f32 %v241, %v1060
        %v1106 = vmul.f32 %v242, %v1065
        %v1107 = vmul.f32 %v243, %v1070
        %v1108 = vmul.f32 %v244, %v1075
        %v1109 = vmul.f32 %v245, %v1080
        %v1110 = vmul.f32 %v246, %v1085
        %v1111 = vmul.f32 %v247, %v1090
        %v1112 = vmul.f32 %v248, %v1095
        %v1113 = vsel %vm260, %v1097, 0.0
        %v1114 = vrot.slane %v1113, 4
        %v1115 = vadd.f32 %v1113, %v1114
        %v1116 = vrot.slane %v1115, 2
        %v1117 = vadd.f32 %v1115, %v1116
        %v1118 = vrot.slane %v1117, 1
        %v1119 = vadd.f32 %v1117, %v1118
        %v1120 = vsel %vm260, %v1098, 0.0
        %v1121 = vrot.slane %v1120, 4
        %v1122 = vadd.f32 %v1120, %v1121
        %v1123 = vrot.slane %v1122, 2
        %v1124 = vadd.f32 %v1122, %v1123
        %v1125 = vrot.slane %v1124, 1
        %v1126 = vadd.f32 %v1124, %v1125
        %v1127 = vsel %vm260, %v1099, 0.0
        %v1128 = vrot.slane %v1127, 4
        %v1129 = vadd.f32 %v1127, %v1128
        %v1130 = vrot.slane %v1129, 2
        %v1131 = vadd.f32 %v1129, %v1130
        %v1132 = vrot.slane %v1131, 1
        %v1133 = vadd.f32 %v1131, %v1132
        %v1134 = vsel %vm260, %v1100, 0.0
        %v1135 = vrot.slane %v1134, 4
        %v1136 = vadd.f32 %v1134, %v1135
        %v1137 = vrot.slane %v1136, 2
        %v1138 = vadd.f32 %v1136, %v1137
        %v1139 = vrot.slane %v1138, 1
        %v1140 = vadd.f32 %v1138, %v1139
        %v1141 = vsel %vm260, %v1101, 0.0
        %v1142 = vrot.slane %v1141, 4
        %v1143 = vadd.f32 %v1141, %v1142
        %v1144 = vrot.slane %v1143, 2
        %v1145 = vadd.f32 %v1143, %v1144
        %v1146 = vrot.slane %v1145, 1
        %v1147 = vadd.f32 %v1145, %v1146
        %v1148 = vsel %vm260, %v1102, 0.0
        %v1149 = vrot.slane %v1148, 4
        %v1150 = vadd.f32 %v1148, %v1149
        %v1151 = vrot.slane %v1150, 2
        %v1152 = vadd.f32 %v1150, %v1151
        %v1153 = vrot.slane %v1152, 1
        %v1154 = vadd.f32 %v1152, %v1153
        %v1155 = vsel %vm260, %v1103, 0.0
        %v1156 = vrot.slane %v1155, 4
        %v1157 = vadd.f32 %v1155, %v1156
        %v1158 = vrot.slane %v1157, 2
        %v1159 = vadd.f32 %v1157, %v1158
        %v1160 = vrot.slane %v1159, 1
        %v1161 = vadd.f32 %v1159, %v1160
        %v1162 = vsel %vm260, %v1104, 0.0
        %v1163 = vrot.slane %v1162, 4
        %v1164 = vadd.f32 %v1162, %v1163
        %v1165 = vrot.slane %v1164, 2
        %v1166 = vadd.f32 %v1164, %v1165
        %v1167 = vrot.slane %v1166, 1
        %v1168 = vadd.f32 %v1166, %v1167
        %v1169 = vsel %vm260, %v1105, 0.0
        %v1170 = vrot.slane %v1169, 4
        %v1171 = vadd.f32 %v1169, %v1170
        %v1172 = vrot.slane %v1171, 2
        %v1173 = vadd.f32 %v1171, %v1172
        %v1174 = vrot.slane %v1173, 1
        %v1175 = vadd.f32 %v1173, %v1174
        %v1176 = vsel %vm260, %v1106, 0.0
        %v1177 = vrot.slane %v1176, 4
        %v1178 = vadd.f32 %v1176, %v1177
        %v1179 = vrot.slane %v1178, 2
        %v1180 = vadd.f32 %v1178, %v1179
        %v1181 = vrot.slane %v1180, 1
        %v1182 = vadd.f32 %v1180, %v1181
        %v1183 = vsel %vm260, %v1107, 0.0
        %v1184 = vrot.slane %v1183, 4
        %v1185 = vadd.f32 %v1183, %v1184
        %v1186 = vrot.slane %v1185, 2
        %v1187 = vadd.f32 %v1185, %v1186
        %v1188 = vrot.slane %v1187, 1
        %v1189 = vadd.f32 %v1187, %v1188
        %v1190 = vsel %vm260, %v1108, 0.0
        %v1191 = vrot.slane %v1190, 4
        %v1192 = vadd.f32 %v1190, %v1191
        %v1193 = vrot.slane %v1192, 2
        %v1194 = vadd.f32 %v1192, %v1193
        %v1195 = vrot.slane %v1194, 1
        %v1196 = vadd.f32 %v1194, %v1195
        %v1197 = vsel %vm260, %v1109, 0.0
        %v1198 = vrot.slane %v1197, 4
        %v1199 = vadd.f32 %v1197, %v1198
        %v1200 = vrot.slane %v1199, 2
        %v1201 = vadd.f32 %v1199, %v1200
        %v1202 = vrot.slane %v1201, 1
        %v1203 = vadd.f32 %v1201, %v1202
        %v1204 = vsel %vm260, %v1110, 0.0
        %v1205 = vrot.slane %v1204, 4
        %v1206 = vadd.f32 %v1204, %v1205
        %v1207 = vrot.slane %v1206, 2
        %v1208 = vadd.f32 %v1206, %v1207
        %v1209 = vrot.slane %v1208, 1
        %v1210 = vadd.f32 %v1208, %v1209
        %v1211 = vsel %vm260, %v1111, 0.0
        %v1212 = vrot.slane %v1211, 4
        %v1213 = vadd.f32 %v1211, %v1212
        %v1214 = vrot.slane %v1213, 2
        %v1215 = vadd.f32 %v1213, %v1214
        %v1216 = vrot.slane %v1215, 1
        %v1217 = vadd.f32 %v1215, %v1216
        %v1218 = vsel %vm260, %v1112, 0.0
        %v1219 = vrot.slane %v1218, 4
        %v1220 = vadd.f32 %v1218, %v1219
        %v1221 = vrot.slane %v1220, 2
        %v1222 = vadd.f32 %v1220, %v1221
        %v1223 = vrot.slane %v1222, 1
        %v1224 = vadd.f32 %v1222, %v1223
        %v1241 = vsel %vm607, %v1126, %v1119
        %v1242 = vsel %vm609, %v1133, %v1241
        %v1243 = vsel %vm611, %v1140, %v1242
        %v1244 = vsel %vm613, %v1147, %v1243
        %v1245 = vsel %vm615, %v1154, %v1244
        %v1246 = vsel %vm617, %v1161, %v1245
        %v1247 = vsel %vm619, %v1168, %v1246
        %v1248 = vsel %vm607, %v1182, %v1175
        %v1249 = vsel %vm609, %v1189, %v1248
        %v1250 = vsel %vm611, %v1196, %v1249
        %v1251 = vsel %vm613, %v1203, %v1250
        %v1252 = vsel %vm615, %v1210, %v1251
        %v1253 = vsel %vm617, %v1217, %v1252
        %v1254 = vsel %vm619, %v1224, %v1253
        %1257 = vst.msk [vmem:[%s230] sm:$0xff] %vm260, %v1247
        %1258 = vst.msk [vmem:[%s230 + $0x8] sm:$0xff] %vm260, %v1254
        %s1259 = sand.u32 %s119, 1
        %s1260 = scalar_lea.sflag [#allocation4], %s1259
        %s1261 = sand.u32 %s119, 1
        %s1262 = smul.addr %s1261, 16
        %s1263 = scalar_lea.vmem [#allocation7], %s1262
        // Predicated region
        $region45: #{tpu_custom_call.1} parent=35 // pred_check
          %p1264 = pneg %p129
        $region46: #{tpu_custom_call.1} parent=35 // pred_check_branch
          %1266 = sbr.rel (%p1264) target = $region48
        $region47: #{tpu_custom_call.1} parent=35 // pred_region
          %s1267 = smul.u32 2, %s22
          %s1269 = ssub.s32 256, 256
          %1270 = vsyncadd %s1260, %s1269
          %s1271 = smul.addr %s1267, 128
          %s1272 = scalar_lea.hbm %s4, %s1271
          %s1273 = sshll.u32 %s1263, 4
          %s1274 = int_to_ptr.vmem [resolvable:$true] %s1273
          %1279 = dma.vmem_to_hbm [thread:$0]  %s1274, 256, %s1272, %s1260, 128, 128, 8
        $region48: #{tpu_custom_call.1} parent=35 // pred_fallthru
          _
      $region36: #{tpu_custom_call.1} parent=5 // pred_fallthru
        _
      %p1280 = scmp.le.s32.totalorder 2, %s17
      // Predicated region
      $region49: #{tpu_custom_call.1} parent=5 // pred_check
        %p1281 = pneg %p1280
      $region50: #{tpu_custom_call.1} parent=5 // pred_check_branch
        %1283 = sbr.rel (%p1281) target = $region52
      $region51: #{tpu_custom_call.1} parent=5 // pred_region
        %s1284 = ssub.s32 %s17, 2
        // Predicated region
        $region53: #{tpu_custom_call.1} parent=51 // pred_check
          %p1285 = pneg %p135
        $region54: #{tpu_custom_call.1} parent=51 // pred_check_branch
          %1287 = sbr.rel (%p1285) target = $region56
        $region55: #{tpu_custom_call.1} parent=51 // pred_region
          %s1288 = sand.u32 %s120, 1
          %s1289 = scalar_lea.sflag [#allocation4], %s1288
          %s1290 = sand.u32 %s120, 1
          %s1291 = smul.addr %s1290, 16
          %s1292 = scalar_lea.vmem [#allocation7], %s1291
          %1293 = dma.done %s1289, 256
        $region56: #{tpu_custom_call.1} parent=51 // pred_fallthru
          _
      $region52: #{tpu_custom_call.1} parent=5 // pred_fallthru
        _
    $region6: #{tpu_custom_call.1} parent=1 // loop_footer
      %s21 = sadd.s32 1, %s17
    $region7: #{tpu_custom_call.1} parent=1 // loop_footer_branch
      %16 = sbr.rel target = $region3
    $region8: #{tpu_custom_call.1} parent=1 // loop_exit
      _
    %1294 = vsyncpa [#allocation3], 1
    %s1295 = scalar_lea.sflag [#allocation3], 1
    %1296 = vsyncpa %s1295, 1
    %1297 = vsyncpa [#allocation6], 1
    %1298 = vsyncpa [#allocation4], 1
    %s1299 = scalar_lea.sflag [#allocation4], 1
    %1300 = vsyncpa %s1299, 1

</llo_original>
